<compile_context>
chip_gen: v6e
topology: v6e:2x2x1
jax: 0.10.0
libtpu: 0.0.40
codegen_flags: <defaults>
</compile_context>

<pallas_src>
import functools

import jax
import jax.numpy as jnp
from jax.experimental import pallas as pl
from jax.experimental.pallas import tpu as pltpu


# ---------------------------------------------------------------------------
# Kernels
# ---------------------------------------------------------------------------

def _fused_merge_ln_matmul_kernel(x_ref, g_ref, b_ref, w_ref, o_ref, *, eps, cin):
    """Fused 2x2-merge + LayerNorm(4C) + Linear(4C->Cout).

    x_ref: (tq, 2, Wo, 2C)   plane 0 = channels [0:2C], plane 1 = [2C:4C]
    g_ref: (2, 2C)           LayerNorm gamma, row k = channels [k*2C:(k+1)*2C]
    b_ref: (2, 2C)           LayerNorm beta, same split
    w_ref: (2, 2C, Cout)     reduction weight (transposed), same split
    o_ref: (tq*Wo, Cout)
    """
    blk = x_ref[...]                                        # (tq, 2, Wo, 2C)
    tq, _, wo, ch = blk.shape
    tokens = tq * wo
    # Leading-dim collapse only; Wo is a multiple of 8 on this path, so the
    # (8,128) tiling is preserved (no relayout copies).
    top = blk[:, 0].reshape(tokens, ch).astype(jnp.float32)  # channels [0:2C]
    bot = blk[:, 1].reshape(tokens, ch).astype(jnp.float32)  # channels [2C:4C]

    inv_cin = 1.0 / float(cin)
    mean = (jnp.sum(top, axis=-1, keepdims=True)
            + jnp.sum(bot, axis=-1, keepdims=True)) * inv_cin
    ct = top - mean
    cb = bot - mean
    var = (jnp.sum(ct * ct, axis=-1, keepdims=True)
           + jnp.sum(cb * cb, axis=-1, keepdims=True)) * inv_cin   # biased (PyTorch LN)
    inv = jax.lax.rsqrt(var + eps)

    g = g_ref[...].astype(jnp.float32)
    b = b_ref[...].astype(jnp.float32)
    yt = ct * inv * g[0:1, :] + b[0:1, :]
    yb = cb * inv * g[1:2, :] + b[1:2, :]

    w = w_ref[...]
    mm_dtype = w.dtype                     # bf16 weights -> native bf16 MXU path
    acc = jnp.dot(yt.astype(mm_dtype), w[0], preferred_element_type=jnp.float32)
    acc = acc + jnp.dot(yb.astype(mm_dtype), w[1], preferred_element_type=jnp.float32)
    o_ref[...] = acc.astype(o_ref.dtype)


def _ln_matmul_kernel(x_ref, g_ref, b_ref, w_ref, o_ref, *, eps):
    """Fallback: LayerNorm over last dim then (tm, Cin) @ (Cin, Cout)."""
    x = x_ref[...].astype(jnp.float32)                      # (tm, Cin)
    mean = jnp.mean(x, axis=-1, keepdims=True)
    c = x - mean
    var = jnp.mean(c * c, axis=-1, keepdims=True)
    y = c * jax.lax.rsqrt(var + eps) * g_ref[...].astype(jnp.float32) \
        + b_ref[...].astype(jnp.float32)
    w = w_ref[...]
    o_ref[...] = jnp.dot(y.astype(w.dtype), w,
                         preferred_element_type=jnp.float32).astype(o_ref.dtype)


# ---------------------------------------------------------------------------
# Wrappers
# ---------------------------------------------------------------------------

def _vmem_limit(bytes_needed):
    return int(min(48 * 2**20, max(16 * 2**20, 4 * bytes_needed)))


def _run_fused(xg, gamma, beta, weight, eps, out_dtype):
    """Fast path: in-kernel 2x2 merge.  Requires even Hp/Wp and Wo % 8 == 0."""
    B, Hp, Wp, C = xg.shape
    Ho, Wo = Hp // 2, Wp // 2
    Ch = 2 * C
    Cin = 4 * C
    Cout = weight.shape[0]
    Nq = B * Ho
    N = Nq * Wo

    xr = xg.reshape(Nq, 2, Wo, Ch)                 # free view of the padded image
    g2 = gamma.reshape(2, Ch)
    b2 = beta.reshape(2, Ch)
    w2 = weight.T.reshape(2, Ch, Cout)             # (Cin, Cout) split in halves

    isz = xr.dtype.itemsize
    osz = jnp.dtype(out_dtype).itemsize
    wsz = w2.dtype.itemsize

    # ~4 MiB of input per grid step (double-buffered by Pallas), <= 1024 tokens.
    tokens_cap = max(8, (4 * 1024 * 1024) // max(1, Cin * isz))
    target_tokens = min(1024, tokens_cap)
    tq = max(1, min(Nq, target_tokens // max(1, Wo)))
    if tq >= Nq and Nq >= 2:
        tq = (Nq + 1) // 2           # keep >= 2 grid steps (v7x: 2 TensorCores)
    grid = (pl.cdiv(Nq, tq),)

    block_in = tq * 2 * Wo * Ch * isz
    block_out = tq * Wo * Cout * osz
    resident = 2 * Ch * Cout * wsz + 2 * (2 * Ch) * g2.dtype.itemsize
    need = 2 * (block_in + block_out) + 2 * resident

    cost = pl.CostEstimate(
        flops=int(2 * N * Cin * Cout),
        transcendentals=int(N),
        bytes_accessed=int(N * Cin * isz + N * Cout * osz + Cin * Cout * wsz),
    )

    out2d = pl.pallas_call(
        functools.partial(_fused_merge_ln_matmul_kernel, eps=eps, cin=Cin),
        out_shape=jax.ShapeDtypeStruct((N, Cout), out_dtype),
        grid=grid,
        in_specs=[
            pl.BlockSpec((tq, 2, Wo, Ch), lambda i: (i, 0, 0, 0)),
            pl.BlockSpec((2, Ch), lambda i: (0, 0)),
            pl.BlockSpec((2, Ch), lambda i: (0, 0)),
            pl.BlockSpec((2, Ch, Cout), lambda i: (0, 0, 0)),
        ],
        out_specs=pl.BlockSpec((tq * Wo, Cout), lambda i: (i, 0)),
        compiler_params=pltpu.CompilerParams(
            dimension_semantics=("parallel",),
            vmem_limit_bytes=_vmem_limit(need),
        ),
        cost_estimate=cost,
    )(xr, g2, b2, w2)

    return out2d.reshape(B, Ho * Wo, Cout)


def _run_unfused(xg, gamma, beta, weight, s, eps, out_dtype):
    """Fallback: XLA-side gather/concat, Pallas LayerNorm + matmul."""
    B, Hp, Wp, C = xg.shape
    Ho, Wo = Hp // s, Wp // s
    Cin = s * s * C
    Cout = weight.shape[0]

    parts = [xg[:, i::s, j::s, :] for i in range(s) for j in range(s)]
    x2d = jnp.concatenate(parts, axis=-1).reshape(B * Ho * Wo, Cin)
    N = x2d.shape[0]

    g2 = gamma.reshape(1, Cin)
    b2 = beta.reshape(1, Cin)
    wt = weight.T                                   # (Cin, Cout)

    isz = x2d.dtype.itemsize
    osz = jnp.dtype(out_dtype).itemsize
    wsz = wt.dtype.itemsize

    tokens_cap = max(8, (4 * 1024 * 1024) // max(1, Cin * isz))
    tm = min(N, min(1024, tokens_cap))
    if tm < N:
        tm = max(8, (tm // 8) * 8)                  # keep block rows 8-aligned
    elif N > 8:
        half = -(-N // 2)
        half = -(-half // 8) * 8                    # >=2 grid steps, 8-aligned
        if half < N:
            tm = half
    grid = (pl.cdiv(N, tm),)

    need = 2 * (tm * Cin * isz + tm * Cout * osz) \
        + 2 * (Cin * Cout * wsz + 2 * Cin * g2.dtype.itemsize)

    cost = pl.CostEstimate(
        flops=int(2 * N * Cin * Cout),
        transcendentals=int(N),
        bytes_accessed=int(N * Cin * isz + N * Cout * osz + Cin * Cout * wsz),
    )

    out2d = pl.pallas_call(
        functools.partial(_ln_matmul_kernel, eps=eps),
        out_shape=jax.ShapeDtypeStruct((N, Cout), out_dtype),
        grid=grid,
        in_specs=[
            pl.BlockSpec((tm, Cin), lambda i: (i, 0)),
            pl.BlockSpec((1, Cin), lambda i: (0, 0)),
            pl.BlockSpec((1, Cin), lambda i: (0, 0)),
            pl.BlockSpec((Cin, Cout), lambda i: (0, 0)),
        ],
        out_specs=pl.BlockSpec((tm, Cout), lambda i: (i, 0)),
        compiler_params=pltpu.CompilerParams(
            dimension_semantics=("parallel",),
            vmem_limit_bytes=_vmem_limit(need),
        ),
        cost_estimate=cost,
    )(x2d, g2, b2, wt)

    return out2d.reshape(B, Ho * Wo, Cout)


def patch_merging_pallas(x, H, W, *, gamma, beta, weight, scale_rate=2, eps=1e-5):
    """Pallas implementation of PatchMerging.forward.

    Args:
      x:       (B, H*W, C) input tokens.
      gamma:   (s*s*C,)  LayerNorm weight.
      beta:    (s*s*C,)  LayerNorm bias.
      weight:  (s*C, s*s*C) Linear weight (nn.Linear convention, no bias).
    Returns:
      (B, ceil(H/2)*ceil(W/2), s*C)   (for s == 2; general s via fallback path)
    """
    B, L, C = x.shape
    assert L == H * W, "input feature has wrong size"
    s = scale_rate

    xg = x.reshape(B, H, W, C)
    # The source module pads with H%2 / W%2 regardless of scale_rate.
    pad_h, pad_w = H % 2, W % 2
    if pad_h or pad_w:
        xg = jnp.pad(xg, ((0, 0), (0, pad_h), (0, pad_w), (0, 0)))
    Hp, Wp = xg.shape[1], xg.shape[2]
    out_dtype = x.dtype

    if s == 2 and Hp % 2 == 0 and Wp % 2 == 0 and (Wp // 2) % 8 == 0:
        return _run_fused(xg, gamma, beta, weight, eps, out_dtype)
    return _run_unfused(xg, gamma, beta, weight, s, eps, out_dtype)


# ---------------------------------------------------------------------------
# Pure-JAX reference (matches the PyTorch forward)
# ---------------------------------------------------------------------------

def _reference(x, H, W, gamma, beta, weight, scale_rate=2, eps=1e-5):
    B, L, C = x.shape
    s = scale_rate
    xg = x.reshape(B, H, W, C)
    if H % 2 or W % 2:
        xg = jnp.pad(xg, ((0, 0), (0, H % 2), (0, W % 2), (0, 0)))
    parts = [xg[:, i::s, j::s, :] for i in range(s) for j in range(s)]
    xc = jnp.concatenate(parts, axis=-1).reshape(B, -1, s * s * C)
    xf = xc.astype(jnp.float32)
    mean = jnp.mean(xf, axis=-1, keepdims=True)
    var = jnp.mean((xf - mean) ** 2, axis=-1, keepdims=True)
    xn = (xf - mean) / jnp.sqrt(var + eps)
    y = xn * gamma.astype(jnp.float32) + beta.astype(jnp.float32)
    return (y @ weight.T.astype(jnp.float32)).astype(x.dtype)


if __name__ == "__main__":
    key = jax.random.PRNGKey(0)

    def make_case(k, B, H, W, C):
        k1, k2, k3, k4 = jax.random.split(k, 4)
        x = jax.random.normal(k1, (B, H * W, C), dtype=jnp.float32)
        gamma = jax.random.normal(k2, (4 * C,), dtype=jnp.float32) * 0.1 + 1.0
        beta = jax.random.normal(k3, (4 * C,), dtype=jnp.float32) * 0.1
        weight = jax.random.normal(k4, (2 * C, 4 * C), dtype=jnp.float32) * 0.02
        return x, gamma, beta, weight

    cases = [
        (2, 16, 16, 32),   # fused path: Wo=8, 4C=128, 2C=64, two grid steps
        (1, 10, 16, 8),    # fused path with a partial (masked) tail block
        (1, 7, 9, 16),     # odd H/W -> pad; Wo=5 -> fallback gather path
    ]
    keys = jax.random.split(key, len(cases))
    for kk, (B, H, W, C) in zip(keys, cases):
        x, gamma, beta, weight = make_case(kk, B, H, W, C)
        out = patch_merging_pallas(x, H, W, gamma=gamma, beta=beta, weight=weight)
        out = jax.block_until_ready(out)
        ref = _reference(x, H, W, gamma, beta, weight)
        Ho, Wo = (H + 1) // 2, (W + 1) // 2
        assert out.shape == (B, Ho * Wo, 2 * C), out.shape
        err = float(jnp.max(jnp.abs(out - ref)))
        assert jnp.allclose(out, ref, atol=1e-3, rtol=1e-3), err

    print("KERNEL_OK")
</pallas_src>

<mosaic_0001>
module attributes {stable_mosaic.version = 11 : i64} {
  func.func @_fused_merge_ln_matmul_kernel(%arg0: i32, %arg1: memref<8x2x8x64xf32, #tpu.memory_space<vmem>>, %arg2: memref<2x64xf32, #tpu.memory_space<vmem>>, %arg3: memref<2x64xf32, #tpu.memory_space<vmem>>, %arg4: memref<2x64x64xf32, #tpu.memory_space<vmem>>, %arg5: memref<64x64xf32, #tpu.memory_space<vmem>>) attributes {dimension_semantics = [#tpu.dimension_semantics<parallel>], iteration_bounds = array<i64: 2>, scalar_prefetch = 0 : i64, scratch_operands = 0 : i64, tpu.core_type = #tpu.core_type<tc>, window_params = [{transform_indices = @transform_0, window_bounds = array<i64: 8, 2, 8, 64>}, {pipeline_mode = #tpu.pipeline_mode<synchronous>, transform_indices = @transform_1, window_bounds = array<i64: 2, 64>}, {pipeline_mode = #tpu.pipeline_mode<synchronous>, transform_indices = @transform_2, window_bounds = array<i64: 2, 64>}, {pipeline_mode = #tpu.pipeline_mode<synchronous>, transform_indices = @transform_3, window_bounds = array<i64: 2, 64, 64>}, {transform_indices = @transform_4, window_bounds = array<i64: 64, 64>}]} {
    %c0 = arith.constant 0 : index
    %c0_0 = arith.constant 0 : index
    %c0_1 = arith.constant 0 : index
    %c0_2 = arith.constant 0 : index
    %0 = vector.load %arg1[%c0, %c0_0, %c0_1, %c0_2] : memref<8x2x8x64xf32, #tpu.memory_space<vmem>>, vector<8x2x8x64xf32>
    %1 = vector.extract_strided_slice %0 {offsets = [0, 0, 0, 0], sizes = [8, 1, 8, 64], strides = [1, 1, 1, 1]} : vector<8x2x8x64xf32> to vector<8x1x8x64xf32>
    %2 = vector.shape_cast %1 : vector<8x1x8x64xf32> to vector<8x8x64xf32>
    %3 = vector.shape_cast %2 : vector<8x8x64xf32> to vector<64x64xf32>
    %4 = vector.extract_strided_slice %0 {offsets = [0, 1, 0, 0], sizes = [8, 1, 8, 64], strides = [1, 1, 1, 1]} : vector<8x2x8x64xf32> to vector<8x1x8x64xf32>
    %5 = vector.shape_cast %4 : vector<8x1x8x64xf32> to vector<8x8x64xf32>
    %6 = vector.shape_cast %5 : vector<8x8x64xf32> to vector<64x64xf32>
    %cst = arith.constant dense<0.000000e+00> : vector<64xf32>
    %7 = vector.multi_reduction <add>, %3, %cst [1] : vector<64x64xf32> to vector<64xf32>
    %8 = vector.shape_cast %7 : vector<64xf32> to vector<64x1xf32>
    %cst_3 = arith.constant dense<0.000000e+00> : vector<64xf32>
    %9 = vector.multi_reduction <add>, %6, %cst_3 [1] : vector<64x64xf32> to vector<64xf32>
    %10 = vector.shape_cast %9 : vector<64xf32> to vector<64x1xf32>
    %11 = arith.addf %8, %10 : vector<64x1xf32>
    %cst_4 = arith.constant 7.812500e-03 : f32
    %12 = vector.broadcast %cst_4 : f32 to vector<64x1xf32>
    %13 = arith.mulf %11, %12 : vector<64x1xf32>
    %14 = vector.broadcast %13 : vector<64x1xf32> to vector<64x64xf32>
    %15 = arith.subf %3, %14 : vector<64x64xf32>
    %16 = vector.broadcast %13 : vector<64x1xf32> to vector<64x64xf32>
    %17 = arith.subf %6, %16 : vector<64x64xf32>
    %18 = arith.mulf %15, %15 : vector<64x64xf32>
    %cst_5 = arith.constant dense<0.000000e+00> : vector<64xf32>
    %19 = vector.multi_reduction <add>, %18, %cst_5 [1] : vector<64x64xf32> to vector<64xf32>
    %20 = vector.shape_cast %19 : vector<64xf32> to vector<64x1xf32>
    %21 = arith.mulf %17, %17 : vector<64x64xf32>
    %cst_6 = arith.constant dense<0.000000e+00> : vector<64xf32>
    %22 = vector.multi_reduction <add>, %21, %cst_6 [1] : vector<64x64xf32> to vector<64xf32>
    %23 = vector.shape_cast %22 : vector<64xf32> to vector<64x1xf32>
    %24 = arith.addf %20, %23 : vector<64x1xf32>
    %cst_7 = arith.constant 7.812500e-03 : f32
    %25 = vector.broadcast %cst_7 : f32 to vector<64x1xf32>
    %26 = arith.mulf %24, %25 : vector<64x1xf32>
    %cst_8 = arith.constant 9.99999974E-6 : f32
    %27 = vector.broadcast %cst_8 : f32 to vector<64x1xf32>
    %28 = arith.addf %26, %27 : vector<64x1xf32>
    %29 = math.rsqrt %28 : vector<64x1xf32>
    %c0_9 = arith.constant 0 : index
    %c0_10 = arith.constant 0 : index
    %30 = vector.load %arg2[%c0_9, %c0_10] : memref<2x64xf32, #tpu.memory_space<vmem>>, vector<2x64xf32>
    %c0_11 = arith.constant 0 : index
    %c0_12 = arith.constant 0 : index
    %31 = vector.load %arg3[%c0_11, %c0_12] : memref<2x64xf32, #tpu.memory_space<vmem>>, vector<2x64xf32>
    %32 = vector.broadcast %29 : vector<64x1xf32> to vector<64x64xf32>
    %33 = arith.mulf %15, %32 : vector<64x64xf32>
    %34 = vector.extract_strided_slice %30 {offsets = [0, 0], sizes = [1, 64], strides = [1, 1]} : vector<2x64xf32> to vector<1x64xf32>
    %35 = vector.broadcast %34 : vector<1x64xf32> to vector<64x64xf32>
    %36 = arith.mulf %33, %35 : vector<64x64xf32>
    %37 = vector.extract_strided_slice %31 {offsets = [0, 0], sizes = [1, 64], strides = [1, 1]} : vector<2x64xf32> to vector<1x64xf32>
    %38 = vector.broadcast %37 : vector<1x64xf32> to vector<64x64xf32>
    %39 = arith.addf %36, %38 : vector<64x64xf32>
    %40 = vector.broadcast %29 : vector<64x1xf32> to vector<64x64xf32>
    %41 = arith.mulf %17, %40 : vector<64x64xf32>
    %42 = vector.extract_strided_slice %30 {offsets = [1, 0], sizes = [1, 64], strides = [1, 1]} : vector<2x64xf32> to vector<1x64xf32>
    %43 = vector.broadcast %42 : vector<1x64xf32> to vector<64x64xf32>
    %44 = arith.mulf %41, %43 : vector<64x64xf32>
    %45 = vector.extract_strided_slice %31 {offsets = [1, 0], sizes = [1, 64], strides = [1, 1]} : vector<2x64xf32> to vector<1x64xf32>
    %46 = vector.broadcast %45 : vector<1x64xf32> to vector<64x64xf32>
    %47 = arith.addf %44, %46 : vector<64x64xf32>
    %c0_13 = arith.constant 0 : index
    %c0_14 = arith.constant 0 : index
    %c0_15 = arith.constant 0 : index
    %48 = vector.load %arg4[%c0_13, %c0_14, %c0_15] : memref<2x64x64xf32, #tpu.memory_space<vmem>>, vector<2x64x64xf32>
    %49 = vector.extract_strided_slice %48 {offsets = [0, 0, 0], sizes = [1, 64, 64], strides = [1, 1, 1]} : vector<2x64x64xf32> to vector<1x64x64xf32>
    %50 = vector.shape_cast %49 : vector<1x64x64xf32> to vector<64x64xf32>
    %cst_16 = arith.constant dense<0.000000e+00> : vector<64x64xf32>
    %51 = tpu.matmul %39, %50, %cst_16 {dimension_numbers = #tpu.dot_dimension_numbers<[1], [0], [0], [1], [0, 0, 1, 1], [], []>} : vector<64x64xf32>, vector<64x64xf32>, vector<64x64xf32> -> vector<64x64xf32>
    %52 = vector.extract_strided_slice %48 {offsets = [1, 0, 0], sizes = [1, 64, 64], strides = [1, 1, 1]} : vector<2x64x64xf32> to vector<1x64x64xf32>
    %53 = vector.shape_cast %52 : vector<1x64x64xf32> to vector<64x64xf32>
    %cst_17 = arith.constant dense<0.000000e+00> : vector<64x64xf32>
    %54 = tpu.matmul %47, %53, %cst_17 {dimension_numbers = #tpu.dot_dimension_numbers<[1], [0], [0], [1], [0, 0, 1, 1], [], []>} : vector<64x64xf32>, vector<64x64xf32>, vector<64x64xf32> -> vector<64x64xf32>
    %55 = arith.addf %51, %54 : vector<64x64xf32>
    %c0_18 = arith.constant 0 : index
    %c0_19 = arith.constant 0 : index
    %56 = vector.load %arg5[%c0_18, %c0_19] : memref<64x64xf32, #tpu.memory_space<vmem>>, vector<64x64xf32>
    tpu.vector_store %arg5[%c0_18, %c0_19], %55 {strides = array<i32>} : memref<64x64xf32, #tpu.memory_space<vmem>>, vector<64x64xf32>,
    return
  }
  func.func @transform_0(%arg0: i32) -> (i32, i32, i32, i32) {
    %c0_i32 = arith.constant 0 : i32
    %c0_i32_0 = arith.constant 0 : i32
    %c0_i32_1 = arith.constant 0 : i32
    %c0_i32_2 = arith.constant 0 : i32
    return %arg0, %c0_i32, %c0_i32_0, %c0_i32_1 : i32, i32, i32, i32
  }
  func.func @transform_1(%arg0: i32) -> (i32, i32) {
    %c0_i32 = arith.constant 0 : i32
    %c0_i32_0 = arith.constant 0 : i32
    %c0_i32_1 = arith.constant 0 : i32
    return %c0_i32, %c0_i32_0 : i32, i32
  }
  func.func @transform_2(%arg0: i32) -> (i32, i32) {
    %c0_i32 = arith.constant 0 : i32
    %c0_i32_0 = arith.constant 0 : i32
    %c0_i32_1 = arith.constant 0 : i32
    return %c0_i32, %c0_i32_0 : i32, i32
  }
  func.func @transform_3(%arg0: i32) -> (i32, i32, i32) {
    %c0_i32 = arith.constant 0 : i32
    %c0_i32_0 = arith.constant 0 : i32
    %c0_i32_1 = arith.constant 0 : i32
    %c0_i32_2 = arith.constant 0 : i32
    return %c0_i32, %c0_i32_0, %c0_i32_1 : i32, i32, i32
  }
  func.func @transform_4(%arg0: i32) -> (i32, i32) {
    %c0_i32 = arith.constant 0 : i32
    %c0_i32_0 = arith.constant 0 : i32
    return %arg0, %c0_i32 : i32, i32
  }
}

</mosaic_0001>

<llo_original>
// kernel: tpu_custom_call.1
$region0: #{tpu_custom_call.1}
  #allocation0 [shape = 'u32[]', space=smem, size = 0x4, offset = 0x4, fixed_abs, tag = 'smem constant byte address 0x4 - core index']
  #allocation1 [shape = 'u32[144,128]{1,0:T(1,128)}', space=vmem, size = 0x12000, scoped, tag = 'internal scratch']
  %s0 = inlined_call_operand.hbm [shape: f32[16,2,8,64], index: 0, kind: input, shape index: {}]
  %s1 = inlined_call_operand.hbm [shape: f32[2,64], index: 1, kind: input, shape index: {}]
  %s2 = inlined_call_operand.vmem [shape: f32[2,64], index: 2, kind: input, shape index: {}]
  %s3 = inlined_call_operand.hbm [shape: f32[2,64,64], index: 3, kind: input, shape index: {}]
  %s4 = inlined_call_operand.vmem [shape: f32[128,64], index: 4, kind: output, shape index: {}]
  %s5 = sld [smem:[#allocation0]]
  $region61: #{tpu_custom_call.1} parent=0
    _
  %s7 = ssub.s32 1, %s5
  %s8 = scalar_select 0, %s7, %s5
  $region1: #{tpu_custom_call.1} parent=0
    #allocation2 [shape = 'u8[131072]{0}', space=vmem, size = 0x20000, scoped, tag = 'input window, operand 0']
    #allocation3 [shape = 's32[2]{0}', space=sflag, size = 0x8, scoped, tag = 'scoped memory for tpu_custom_call.1']
    #allocation4 [shape = 'u8[1024]{0}', space=vmem, size = 0x400, scoped, tag = 'input window, operand 1, single buffered']
    #allocation5 [shape = 's32[1]{0}', space=sflag, size = 0x4, scoped, tag = 'scoped memory for tpu_custom_call.1']
    #allocation6 [shape = 'u8[65536]{0}', space=vmem, size = 0x10000, scoped, tag = 'input window, operand 3, single buffered']
    %9 = vsyncpa [#allocation3], 0
    %s10 = scalar_lea.sflag [#allocation3], 1
    %11 = vsyncpa %s10, 0
    %12 = vsyncpa [#allocation5], 0
    loop: start=0, step=1, limit=4
    $region2: #{tpu_custom_call.1} parent=1 // loop_pre_header
      _
    $region3: #{tpu_custom_call.1} parent=1 // loop_header
      %s14 = sphi 0, %s18
      %p15 = scmp.ge.s32.totalorder %s14, 4
      %s24 = sphi 0, %s26
      %s27 = sphi 0, %s24
      %s28 = sphi 0, %s27
      %s44 = sphi 0, %s28
      %s48 = sphi 0, %s48
      %s50 = sphi 0, %s48
      %s51 = sphi 0, %s50
      %s65 = sphi 0, %s51
      %s69 = sphi 0, %s69
      %s71 = sphi 0, %s69
      %s72 = sphi 0, %s71
      %s86 = sphi 0, %s72
      %s90 = sphi 0, %s90
      %s92 = sphi 0, %s90
      %s93 = sphi 0, %s92
      %s107 = sphi 0, %s93
      %s113 = sphi 0, %s115
      %s116 = sphi 0, %s113
      %s117 = sphi 0, %s116
      %s133 = sphi 0, %s117
    $region4: #{tpu_custom_call.1} parent=1 // loop_header_branch
      %17 = sbr.rel (%p15) target = $region8
    $region5: #{tpu_custom_call.1} parent=1 // loop_body
      %s19 = ssub.s32 %s14, 1
      %s20 = ssub.s32 %s14, 2
      %s21 = sadd.s32 %s14, 1
      %s22 = ssub.s32 %s14, %s21
      %p23 = scmp.eq.s32.totalorder %s22, 0
      %s25 = sadd.s32 %s24, 1
      %s26 = scalar_select %p23, %s24, %s25
      %p29 = pneg %p23
      %p30 = scmp.eq.s32.totalorder %s14, 1
      %p31 = por %p29, %p30
      %p32 = scmp.ne.s32.totalorder %s24, %s27
      %p33 = scmp.eq.s32.totalorder %s14, 0
      %p34 = por %p32, %p33
      %p35 = scmp.ne.s32.totalorder %s24, %s27
      %p36 = scmp.eq.s32.totalorder %s19, 1
      %p37 = por %p35, %p36
      %p38 = scmp.ne.s32.totalorder %s27, %s28
      %p39 = scmp.eq.s32.totalorder %s19, 0
      %p40 = por %p38, %p39
      %p41 = scmp.ne.s32.totalorder %s27, %s28
      %p42 = scmp.eq.s32.totalorder %s20, 1
      %p43 = por %p41, %p42
      %p45 = scmp.ne.s32.totalorder %s28, %s44
      %p46 = scmp.eq.s32.totalorder %s20, 0
      %p47 = por %p45, %p46
      %s49 = sadd.s32 %s48, 1
      %p52 = scmp.eq.s32.totalorder %s14, 1
      %p53 = scmp.ne.s32.totalorder %s48, %s50
      %p54 = scmp.eq.s32.totalorder %s14, 0
      %p55 = por %p53, %p54
      %p56 = scmp.ne.s32.totalorder %s48, %s50
      %p57 = scmp.eq.s32.totalorder %s19, 1
      %p58 = por %p56, %p57
      %p59 = scmp.ne.s32.totalorder %s50, %s51
      %p60 = scmp.eq.s32.totalorder %s19, 0
      %p61 = por %p59, %p60
      %p62 = scmp.ne.s32.totalorder %s50, %s51
      %p63 = scmp.eq.s32.totalorder %s20, 1
      %p64 = por %p62, %p63
      %p66 = scmp.ne.s32.totalorder %s51, %s65
      %p67 = scmp.eq.s32.totalorder %s20, 0
      %p68 = por %p66, %p67
      %s70 = sadd.s32 %s69, 1
      %p73 = scmp.eq.s32.totalorder %s14, 1
      %p74 = scmp.ne.s32.totalorder %s69, %s71
      %p75 = scmp.eq.s32.totalorder %s14, 0
      %p76 = por %p74, %p75
      %p77 = scmp.ne.s32.totalorder %s69, %s71
      %p78 = scmp.eq.s32.totalorder %s19, 1
      %p79 = por %p77, %p78
      %p80 = scmp.ne.s32.totalorder %s71, %s72
      %p81 = scmp.eq.s32.totalorder %s19, 0
      %p82 = por %p80, %p81
      %p83 = scmp.ne.s32.totalorder %s71, %s72
      %p84 = scmp.eq.s32.totalorder %s20, 1
      %p85 = por %p83, %p84
      %p87 = scmp.ne.s32.totalorder %s72, %s86
      %p88 = scmp.eq.s32.totalorder %s20, 0
      %p89 = por %p87, %p88
      %s91 = sadd.s32 %s90, 1
      %p94 = scmp.eq.s32.totalorder %s14, 1
      %p95 = scmp.ne.s32.totalorder %s90, %s92
      %p96 = scmp.eq.s32.totalorder %s14, 0
      %p97 = por %p95, %p96
      %p98 = scmp.ne.s32.totalorder %s90, %s92
      %p99 = scmp.eq.s32.totalorder %s19, 1
      %p100 = por %p98, %p99
      %p101 = scmp.ne.s32.totalorder %s92, %s93
      %p102 = scmp.eq.s32.totalorder %s19, 0
      %p103 = por %p101, %p102
      %p104 = scmp.ne.s32.totalorder %s92, %s93
      %p105 = scmp.eq.s32.totalorder %s20, 1
      %p106 = por %p104, %p105
      %p108 = scmp.ne.s32.totalorder %s93, %s107
      %p109 = scmp.eq.s32.totalorder %s20, 0
      %p110 = por %p108, %p109
      %s111 = ssub.s32 %s14, %s21
      %p112 = scmp.eq.s32.totalorder %s111, 0
      %s114 = sadd.s32 %s113, 1
      %s115 = scalar_select %p112, %s113, %s114
      %p118 = pneg %p112
      %p119 = scmp.eq.s32.totalorder %s14, 1
      %p120 = por %p118, %p119
      %p121 = scmp.ne.s32.totalorder %s113, %s116
      %p122 = scmp.eq.s32.totalorder %s14, 0
      %p123 = por %p121, %p122
      %p124 = scmp.ne.s32.totalorder %s113, %s116
      %p125 = scmp.eq.s32.totalorder %s19, 1
      %p126 = por %p124, %p125
      %p127 = scmp.ne.s32.totalorder %s116, %s117
      %p128 = scmp.eq.s32.totalorder %s19, 0
      %p129 = por %p127, %p128
      %p130 = scmp.ne.s32.totalorder %s116, %s117
      %p131 = scmp.eq.s32.totalorder %s20, 1
      %p132 = por %p130, %p131
      %p134 = scmp.ne.s32.totalorder %s117, %s133
      %p135 = scmp.eq.s32.totalorder %s20, 0
      %p136 = por %p134, %p135
      %p137 = scmp.le.s32.totalorder 1, %s14
      %p138 = scmp.lt.s32.totalorder %s14, 3
      %p139 = pnand %p137, %p138
      %p140 = pneg %p139
      // Predicated region
      $region9: #{tpu_custom_call.1} parent=5 // pred_check
        _
      $region10: #{tpu_custom_call.1} parent=5 // pred_check_branch
        %142 = sbr.rel (%p139) target = $region12
      $region11: #{tpu_custom_call.1} parent=5 // pred_region
        %s143 = ssub.s32 %s14, 1
        // Predicated region
        $region13: #{tpu_custom_call.1} parent=11 // pred_check
          %p144 = pneg %p61
        $region14: #{tpu_custom_call.1} parent=11 // pred_check_branch
          %146 = sbr.rel (%p144) target = $region16
        $region15: #{tpu_custom_call.1} parent=11 // pred_region
          %s148 = ssub.s32 32, 32
          %149 = vsyncadd [#allocation5], %s148
          %s151 = sshll.u32 [#allocation4], 4
          %s152 = int_to_ptr.vmem [resolvable:$true] %s151
          %154 = dma.hbm_to_vmem [thread:$0]  %s1, 32, %s152, [#allocation5]
        $region16: #{tpu_custom_call.1} parent=11 // pred_fallthru
          _
        // Predicated region
        $region17: #{tpu_custom_call.1} parent=11 // pred_check
          %p155 = pneg %p82
        $region18: #{tpu_custom_call.1} parent=11 // pred_check_branch
          %157 = sbr.rel (%p155) target = $region20
        $region19: #{tpu_custom_call.1} parent=11 // pred_region
          _
        $region20: #{tpu_custom_call.1} parent=11 // pred_fallthru
          _
        // Predicated region
        $region21: #{tpu_custom_call.1} parent=11 // pred_check
          %p158 = pneg %p103
        $region22: #{tpu_custom_call.1} parent=11 // pred_check_branch
          %160 = sbr.rel (%p158) target = $region24
        $region23: #{tpu_custom_call.1} parent=11 // pred_region
          %s162 = ssub.s32 2048, 2048
          %163 = vsyncadd [#allocation5], %s162
          %s164 = sshll.u32 [#allocation6], 4
          %s165 = int_to_ptr.vmem [resolvable:$true] %s164
          %170 = dma.hbm_to_vmem [thread:$0]  %s3, 2048, %s165, [#allocation5], 128, 128, 8
        $region24: #{tpu_custom_call.1} parent=11 // pred_fallthru
          _
      $region12: #{tpu_custom_call.1} parent=5 // pred_fallthru
        _
      %p171 = scmp.lt.s32.totalorder %s14, 2
      // Predicated region
      $region25: #{tpu_custom_call.1} parent=5 // pred_check
        %p172 = pneg %p171
      $region26: #{tpu_custom_call.1} parent=5 // pred_check_branch
        %174 = sbr.rel (%p172) target = $region28
      $region27: #{tpu_custom_call.1} parent=5 // pred_region
        // Predicated region
        $region29: #{tpu_custom_call.1} parent=27 // pred_check
          %p175 = pneg %p34
        $region30: #{tpu_custom_call.1} parent=27 // pred_check_branch
          %177 = sbr.rel (%p175) target = $region32
        $region31: #{tpu_custom_call.1} parent=27 // pred_region
          %s178 = sand.u32 %s24, 1
          %s179 = scalar_lea.sflag [#allocation3], %s178
          %s180 = sand.u32 %s24, 1
          %s181 = smul.addr %s180, 128
          %s182 = scalar_lea.vmem [#allocation2], %s181
          %s183 = smul.u32 8, %s14
          %s185 = ssub.s32 2048, 2048
          %186 = vsyncadd %s179, %s185
          %s187 = smul.addr %s183, 2
          %s188 = smul.addr %s187, 128
          %s189 = scalar_lea.hbm %s0, %s188
          %s190 = sshll.u32 %s182, 4
          %s191 = int_to_ptr.vmem [resolvable:$true] %s190
          %196 = dma.hbm_to_vmem [thread:$0]  %s189, 2048, %s191, %s179, 128, 128, 8
        $region32: #{tpu_custom_call.1} parent=27 // pred_fallthru
          _
      $region28: #{tpu_custom_call.1} parent=5 // pred_fallthru
        _
      %p197 = scmp.le.s32.totalorder 1, %s14
      %p198 = scmp.lt.s32.totalorder %s14, 3
      %p199 = pnand %p197, %p198
      %p200 = pneg %p199
      // Predicated region
      $region33: #{tpu_custom_call.1} parent=5 // pred_check
        _
      $region34: #{tpu_custom_call.1} parent=5 // pred_check_branch
        %202 = sbr.rel (%p199) target = $region36
      $region35: #{tpu_custom_call.1} parent=5 // pred_region
        %s203 = ssub.s32 %s14, 1
        %s204 = sand.u32 %s27, 1
        %s205 = scalar_lea.sflag [#allocation3], %s204
        %s206 = sand.u32 %s27, 1
        %s207 = smul.addr %s206, 128
        %s208 = scalar_lea.vmem [#allocation2], %s207
        // Predicated region
        $region37: #{tpu_custom_call.1} parent=35 // pred_check
          %p209 = pneg %p40
        $region38: #{tpu_custom_call.1} parent=35 // pred_check_branch
          %211 = sbr.rel (%p209) target = $region40
        $region39: #{tpu_custom_call.1} parent=35 // pred_region
          %212 = dma.done %s205, 2048
        $region40: #{tpu_custom_call.1} parent=35 // pred_fallthru
          _
        // Predicated region
        $region41: #{tpu_custom_call.1} parent=35 // pred_check
          %p213 = pneg %p61
        $region42: #{tpu_custom_call.1} parent=35 // pred_check_branch
          %215 = sbr.rel (%p213) target = $region44
        $region43: #{tpu_custom_call.1} parent=35 // pred_region
          %216 = dma.done [#allocation5], 32
        $region44: #{tpu_custom_call.1} parent=35 // pred_fallthru
          _
        // Predicated region
        $region45: #{tpu_custom_call.1} parent=35 // pred_check
          %p217 = pneg %p103
        $region46: #{tpu_custom_call.1} parent=35 // pred_check_branch
          %219 = sbr.rel (%p217) target = $region48
        $region47: #{tpu_custom_call.1} parent=35 // pred_region
          %220 = dma.done [#allocation5], 2048
        $region48: #{tpu_custom_call.1} parent=35 // pred_fallthru
          _
        %s221 = sand.u32 %s27, 1
        %s222 = scalar_lea.sflag [#allocation3], %s221
        %s223 = sand.u32 %s27, 1
        %s224 = smul.addr %s223, 128
        %s225 = scalar_lea.vmem [#allocation2], %s224
        %p226 = pneg %p40
        %p227 = pneg %p37
        %p228 = pneg %p61
        %p229 = pneg %p58
        %p230 = pneg %p82
        %p231 = pneg %p79
        %p232 = pneg %p103
        %p233 = pneg %p100
        %p234 = pneg %p129
        %p235 = pneg %p126
        %s236 = smul.u32 8, %s19
        %p237 = scmp.lt.s32.totalorder %s236, 15
        %s238 = scalar_select %p237, %s236, 15
        %s239 = smul.addr %s238, 8
        %s240 = scalar_lea.vmem %s4, %s239
        %s241 = smul.u32 8, %s19
        %s242 = smul.u32 8, %s19
        %p243 = scmp.lt.s32.totalorder %s242, 15
        %s244 = scalar_select %p243, %s242, 15
        %s245 = smul.addr %s244, 8
        %s246 = scalar_lea.vmem %s4, %s245
        %s247 = smul.u32 8, %s19
        %v248 = vld [vmem:[%s208] sm:$0xff]
        %v249 = vld [vmem:[%s208 + $0x8] sm:$0xff]
        %v250 = vld [vmem:[%s208 + $0x10] sm:$0xff]
        %v251 = vld [vmem:[%s208 + $0x18] sm:$0xff]
        %v252 = vld [vmem:[%s208 + $0x20] sm:$0xff]
        %v253 = vld [vmem:[%s208 + $0x28] sm:$0xff]
        %v254 = vld [vmem:[%s208 + $0x30] sm:$0xff]
        %v255 = vld [vmem:[%s208 + $0x38] sm:$0xff]
        %v256 = vld [vmem:[%s208 + $0x40] sm:$0xff]
        %v257 = vld [vmem:[%s208 + $0x48] sm:$0xff]
        %v258 = vld [vmem:[%s208 + $0x50] sm:$0xff]
        %v259 = vld [vmem:[%s208 + $0x58] sm:$0xff]
        %v260 = vld [vmem:[%s208 + $0x60] sm:$0xff]
        %v261 = vld [vmem:[%s208 + $0x68] sm:$0xff]
        %v262 = vld [vmem:[%s208 + $0x70] sm:$0xff]
        %v263 = vld [vmem:[%s208 + $0x78] sm:$0xff]
        %vm264 = vcmask 523264
        %v265 = vsel %vm264, %v248, 0.0
        %266 = vadd.xlane.f32.xlu0 %v265
        %v267 = vpop.xlane.xlu0 %266
        %v268 = vsel %vm264, %v250, 0.0
        %269 = vadd.xlane.f32.xlu0 %v268
        %v270 = vpop.xlane.xlu0 %269
        %v271 = vsel %vm264, %v252, 0.0
        %272 = vadd.xlane.f32.xlu0 %v271
        %v273 = vpop.xlane.xlu0 %272
        %v274 = vsel %vm264, %v254, 0.0
        %275 = vadd.xlane.f32.xlu0 %v274
        %v276 = vpop.xlane.xlu0 %275
        %v277 = vsel %vm264, %v256, 0.0
        %278 = vadd.xlane.f32.xlu0 %v277
        %v279 = vpop.xlane.xlu0 %278
        %v280 = vsel %vm264, %v258, 0.0
        %281 = vadd.xlane.f32.xlu0 %v280
        %v282 = vpop.xlane.xlu0 %281
        %v283 = vsel %vm264, %v260, 0.0
        %284 = vadd.xlane.f32.xlu0 %v283
        %v285 = vpop.xlane.xlu0 %284
        %v286 = vsel %vm264, %v262, 0.0
        %287 = vadd.xlane.f32.xlu0 %v286
        %v288 = vpop.xlane.xlu0 %287
        %v289 = vsel %vm264, %v249, 0.0
        %290 = vadd.xlane.f32.xlu0 %v289
        %v291 = vpop.xlane.xlu0 %290
        %v292 = vsel %vm264, %v251, 0.0
        %293 = vadd.xlane.f32.xlu0 %v292
        %v294 = vpop.xlane.xlu0 %293
        %v295 = vsel %vm264, %v253, 0.0
        %296 = vadd.xlane.f32.xlu0 %v295
        %v297 = vpop.xlane.xlu0 %296
        %v298 = vsel %vm264, %v255, 0.0
        %299 = vadd.xlane.f32.xlu0 %v298
        %v300 = vpop.xlane.xlu0 %299
        %v301 = vsel %vm264, %v257, 0.0
        %302 = vadd.xlane.f32.xlu0 %v301
        %v303 = vpop.xlane.xlu0 %302
        %v304 = vsel %vm264, %v259, 0.0
        %305 = vadd.xlane.f32.xlu0 %v304
        %v306 = vpop.xlane.xlu0 %305
        %v307 = vsel %vm264, %v261, 0.0
        %308 = vadd.xlane.f32.xlu0 %v307
        %v309 = vpop.xlane.xlu0 %308
        %v310 = vsel %vm264, %v263, 0.0
        %311 = vadd.xlane.f32.xlu0 %v310
        %v312 = vpop.xlane.xlu0 %311
        %v313 = vadd.f32 %v267, %v291
        %v314 = vadd.f32 %v270, %v294
        %v315 = vadd.f32 %v273, %v297
        %v316 = vadd.f32 %v276, %v300
        %v317 = vadd.f32 %v279, %v303
        %v318 = vadd.f32 %v282, %v306
        %v319 = vadd.f32 %v285, %v309
        %v320 = vadd.f32 %v288, %v312
        %v321 = vmul.f32 %v313, 0.0078125
        %v322 = vmul.f32 %v314, 0.0078125
        %v323 = vmul.f32 %v315, 0.0078125
        %v324 = vmul.f32 %v316, 0.0078125
        %v325 = vmul.f32 %v317, 0.0078125
        %v326 = vmul.f32 %v318, 0.0078125
        %v327 = vmul.f32 %v319, 0.0078125
        %v328 = vmul.f32 %v320, 0.0078125
        %v329 = vsub.f32 %v248, %v321
        %v330 = vsub.f32 %v250, %v322
        %v331 = vsub.f32 %v252, %v323
        %v332 = vsub.f32 %v254, %v324
        %v333 = vsub.f32 %v256, %v325
        %v334 = vsub.f32 %v258, %v326
        %v335 = vsub.f32 %v260, %v327
        %v336 = vsub.f32 %v262, %v328
        %v337 = vsub.f32 %v249, %v321
        %v338 = vsub.f32 %v251, %v322
        %v339 = vsub.f32 %v253, %v323
        %v340 = vsub.f32 %v255, %v324
        %v341 = vsub.f32 %v257, %v325
        %v342 = vsub.f32 %v259, %v326
        %v343 = vsub.f32 %v261, %v327
        %v344 = vsub.f32 %v263, %v328
        %v345 = vmul.f32 %v329, %v329
        %v346 = vmul.f32 %v330, %v330
        %v347 = vmul.f32 %v331, %v331
        %v348 = vmul.f32 %v332, %v332
        %v349 = vmul.f32 %v333, %v333
        %v350 = vmul.f32 %v334, %v334
        %v351 = vmul.f32 %v335, %v335
        %v352 = vmul.f32 %v336, %v336
        %v353 = vsel %vm264, %v345, 0.0
        %354 = vadd.xlane.f32.xlu0 %v353
        %v355 = vpop.xlane.xlu0 %354
        %v356 = vsel %vm264, %v346, 0.0
        %357 = vadd.xlane.f32.xlu0 %v356
        %v358 = vpop.xlane.xlu0 %357
        %v359 = vsel %vm264, %v347, 0.0
        %360 = vadd.xlane.f32.xlu0 %v359
        %v361 = vpop.xlane.xlu0 %360
        %v362 = vsel %vm264, %v348, 0.0
        %363 = vadd.xlane.f32.xlu0 %v362
        %v364 = vpop.xlane.xlu0 %363
        %v365 = vsel %vm264, %v349, 0.0
        %366 = vadd.xlane.f32.xlu0 %v365
        %v367 = vpop.xlane.xlu0 %366
        %v368 = vsel %vm264, %v350, 0.0
        %369 = vadd.xlane.f32.xlu0 %v368
        %v370 = vpop.xlane.xlu0 %369
        %v371 = vsel %vm264, %v351, 0.0
        %372 = vadd.xlane.f32.xlu0 %v371
        %v373 = vpop.xlane.xlu0 %372
        %v374 = vsel %vm264, %v352, 0.0
        %375 = vadd.xlane.f32.xlu0 %v374
        %v376 = vpop.xlane.xlu0 %375
        %v377 = vmul.f32 %v337, %v337
        %v378 = vmul.f32 %v338, %v338
        %v379 = vmul.f32 %v339, %v339
        %v380 = vmul.f32 %v340, %v340
        %v381 = vmul.f32 %v341, %v341
        %v382 = vmul.f32 %v342, %v342
        %v383 = vmul.f32 %v343, %v343
        %v384 = vmul.f32 %v344, %v344
        %v385 = vsel %vm264, %v377, 0.0
        %386 = vadd.xlane.f32.xlu0 %v385
        %v387 = vpop.xlane.xlu0 %386
        %v388 = vsel %vm264, %v378, 0.0
        %389 = vadd.xlane.f32.xlu0 %v388
        %v390 = vpop.xlane.xlu0 %389
        %v391 = vsel %vm264, %v379, 0.0
        %392 = vadd.xlane.f32.xlu0 %v391
        %v393 = vpop.xlane.xlu0 %392
        %v394 = vsel %vm264, %v380, 0.0
        %395 = vadd.xlane.f32.xlu0 %v394
        %v396 = vpop.xlane.xlu0 %395
        %v397 = vsel %vm264, %v381, 0.0
        %398 = vadd.xlane.f32.xlu0 %v397
        %v399 = vpop.xlane.xlu0 %398
        %v400 = vsel %vm264, %v382, 0.0
        %401 = vadd.xlane.f32.xlu0 %v400
        %v402 = vpop.xlane.xlu0 %401
        %v403 = vsel %vm264, %v383, 0.0
        %404 = vadd.xlane.f32.xlu0 %v403
        %v405 = vpop.xlane.xlu0 %404
        %v406 = vsel %vm264, %v384, 0.0
        %407 = vadd.xlane.f32.xlu0 %v406
        %v408 = vpop.xlane.xlu0 %407
        %v409 = vadd.f32 %v355, %v387
        %v410 = vadd.f32 %v358, %v390
        %v411 = vadd.f32 %v361, %v393
        %v412 = vadd.f32 %v364, %v396
        %v413 = vadd.f32 %v367, %v399
        %v414 = vadd.f32 %v370, %v402
        %v415 = vadd.f32 %v373, %v405
        %v416 = vadd.f32 %v376, %v408
        %v417 = vmul.f32 %v409, 0.0078125
        %v418 = vmul.f32 %v410, 0.0078125
        %v419 = vmul.f32 %v411, 0.0078125
        %v420 = vmul.f32 %v412, 0.0078125
        %v421 = vmul.f32 %v413, 0.0078125
        %v422 = vmul.f32 %v414, 0.0078125
        %v423 = vmul.f32 %v415, 0.0078125
        %v424 = vmul.f32 %v416, 0.0078125
        %v425 = vadd.f32 %v417, 1e-05
        %v426 = vadd.f32 %v418, 1e-05
        %v427 = vadd.f32 %v419, 1e-05
        %v428 = vadd.f32 %v420, 1e-05
        %v429 = vadd.f32 %v421, 1e-05
        %v430 = vadd.f32 %v422, 1e-05
        %v431 = vadd.f32 %v423, 1e-05
        %v432 = vadd.f32 %v424, 1e-05
        %v433 = vrsqrt.pop %v425
        %v434 = vrsqrt.pop %v426
        %v435 = vrsqrt.pop %v427
        %v436 = vrsqrt.pop %v428
        %v437 = vrsqrt.pop %v429
        %v438 = vrsqrt.pop %v430
        %v439 = vrsqrt.pop %v431
        %v440 = vrsqrt.pop %v432
        %v441 = vld [vmem:[#allocation4] sm:$0x3]
        %v442 = vld [vmem:[%s2] sm:$0x3]
        %v443 = vmul.f32 %v329, %v433
        %v444 = vmul.f32 %v330, %v434
        %v445 = vmul.f32 %v331, %v435
        %v446 = vmul.f32 %v332, %v436
        %v447 = vmul.f32 %v333, %v437
        %v448 = vmul.f32 %v334, %v438
        %v449 = vmul.f32 %v335, %v439
        %v450 = vmul.f32 %v336, %v440
        %v451 = vlaneseq
        %v452 = vshrl.u32 %v451, 7
        %v453 = vsub.s32 0, %v452
        %v454 = vrot.slane %v441, %v453
        %v455 = vmul.f32 %v443, %v454
        %v456 = vmul.f32 %v444, %v454
        %v457 = vmul.f32 %v445, %v454
        %v458 = vmul.f32 %v446, %v454
        %v459 = vmul.f32 %v447, %v454
        %v460 = vmul.f32 %v448, %v454
        %v461 = vmul.f32 %v449, %v454
        %v462 = vmul.f32 %v450, %v454
        %v463 = vlaneseq
        %v464 = vshrl.u32 %v463, 7
        %v465 = vsub.s32 0, %v464
        %v466 = vrot.slane %v442, %v465
        %v467 = vadd.f32 %v455, %v466
        %v468 = vadd.f32 %v456, %v466
        %v469 = vadd.f32 %v457, %v466
        %v470 = vadd.f32 %v458, %v466
        %v471 = vadd.f32 %v459, %v466
        %v472 = vadd.f32 %v460, %v466
        %v473 = vadd.f32 %v461, %v466
        %v474 = vadd.f32 %v462, %v466
        %v475 = vmul.f32 %v337, %v433
        %v476 = vmul.f32 %v338, %v434
        %v477 = vmul.f32 %v339, %v435
        %v478 = vmul.f32 %v340, %v436
        %v479 = vmul.f32 %v341, %v437
        %v480 = vmul.f32 %v342, %v438
        %v481 = vmul.f32 %v343, %v439
        %v482 = vmul.f32 %v344, %v440
        %v483 = vlaneseq
        %v484 = vshrl.u32 %v483, 7
        %v485 = vsub.s32 1, %v484
        %v486 = vrot.slane %v441, %v485
        %v487 = vmul.f32 %v475, %v486
        %v488 = vmul.f32 %v476, %v486
        %v489 = vmul.f32 %v477, %v486
        %v490 = vmul.f32 %v478, %v486
        %v491 = vmul.f32 %v479, %v486
        %v492 = vmul.f32 %v480, %v486
        %v493 = vmul.f32 %v481, %v486
        %v494 = vmul.f32 %v482, %v486
        %v495 = vlaneseq
        %v496 = vshrl.u32 %v495, 7
        %v497 = vsub.s32 1, %v496
        %v498 = vrot.slane %v442, %v497
        %v499 = vadd.f32 %v487, %v498
        %v500 = vadd.f32 %v488, %v498
        %v501 = vadd.f32 %v489, %v498
        %v502 = vadd.f32 %v490, %v498
        %v503 = vadd.f32 %v491, %v498
        %v504 = vadd.f32 %v492, %v498
        %v505 = vadd.f32 %v493, %v498
        %v506 = vadd.f32 %v494, %v498
        %v507 = vld [vmem:[#allocation6] sm:$0xff]
        %v508 = vld [vmem:[#allocation6 + $0x8] sm:$0xff]
        %v509 = vld [vmem:[#allocation6 + $0x10] sm:$0xff]
        %v510 = vld [vmem:[#allocation6 + $0x18] sm:$0xff]
        %v511 = vld [vmem:[#allocation6 + $0x20] sm:$0xff]
        %v512 = vld [vmem:[#allocation6 + $0x28] sm:$0xff]
        %v513 = vld [vmem:[#allocation6 + $0x30] sm:$0xff]
        %v514 = vld [vmem:[#allocation6 + $0x38] sm:$0xff]
        %v515 = vld [vmem:[#allocation6 + $0x40] sm:$0xff]
        %v516 = vld [vmem:[#allocation6 + $0x48] sm:$0xff]
        %v517 = vld [vmem:[#allocation6 + $0x50] sm:$0xff]
        %v518 = vld [vmem:[#allocation6 + $0x58] sm:$0xff]
        %v519 = vld [vmem:[#allocation6 + $0x60] sm:$0xff]
        %v520 = vld [vmem:[#allocation6 + $0x68] sm:$0xff]
        %v521 = vld [vmem:[#allocation6 + $0x70] sm:$0xff]
        %v522 = vld [vmem:[#allocation6 + $0x78] sm:$0xff]
        %v524 = vsel %vm264, %v499, 0
        %v527 = vsel %vm264, %v500, 0
        %v530 = vsel %vm264, %v501, 0
        %v533 = vsel %vm264, %v502, 0
        %v536 = vsel %vm264, %v503, 0
        %v539 = vsel %vm264, %v504, 0
        %v542 = vsel %vm264, %v505, 0
        %v545 = vsel %vm264, %v506, 0
        %547 = vmatprep.subr.mxu0 0.0
        %548 = vmatpush1.msra.mxu0 0.0
        %549 = vmatprep.subr.mxu0 0.0
        %550 = vmatpush1.msra.mxu0 0.0
        %551 = vmatprep.subr.mxu0 0.0
        %552 = vmatpush1.msra.mxu0 0.0
        %553 = vmatprep.subr.mxu0 0.0
        %554 = vmatpush1.msra.mxu0 0.0
        %555 = vmatprep.subr.mxu0 0.0
        %556 = vmatpush1.msra.mxu0 0.0
        %557 = vmatprep.subr.mxu0 0.0
        %558 = vmatpush1.msra.mxu0 0.0
        %559 = vmatprep.subr.mxu0 0.0
        %560 = vmatpush1.msra.mxu0 0.0
        %561 = vmatprep.subr.mxu0 0.0
        %562 = vmatpush1.msra.mxu0 0.0
        %563 = vmatprep.subr.mxu0 0.0
        %564 = vmatpush1.msra.mxu0 %v522
        %565 = vmatprep.subr.mxu0 0.0
        %566 = vmatpush1.msra.mxu0 %v521
        %567 = vmatprep.subr.mxu0 0.0
        %568 = vmatpush1.msra.mxu0 %v520
        %569 = vmatprep.subr.mxu0 0.0
        %570 = vmatpush1.msra.mxu0 %v519
        %571 = vmatprep.subr.mxu0 0.0
        %572 = vmatpush1.msra.mxu0 %v518
        %573 = vmatprep.subr.mxu0 0.0
        %574 = vmatpush1.msra.mxu0 %v517
        %575 = vmatprep.subr.mxu0 0.0
        %576 = vmatpush1.msra.mxu0 %v516
        %577 = vmatprep.subr.mxu0 0.0
        %578 = vmatpush1.msra.mxu0 %v515
        %579 = vmatprep.subr.mxu0 0.0
        %580 = vmatpush2.msra.mxu0 0.0
        %581 = vmatprep.subr.mxu0 0.0
        %582 = vmatpush2.msra.mxu0 0.0
        %583 = vmatprep.subr.mxu0 0.0
        %584 = vmatpush2.msra.mxu0 0.0
        %585 = vmatprep.subr.mxu0 0.0
        %586 = vmatpush2.msra.mxu0 0.0
        %587 = vmatprep.subr.mxu0 0.0
        %588 = vmatpush2.msra.mxu0 0.0
        %589 = vmatprep.subr.mxu0 0.0
        %590 = vmatpush2.msra.mxu0 0.0
        %591 = vmatprep.subr.mxu0 0.0
        %592 = vmatpush2.msra.mxu0 0.0
        %593 = vmatprep.subr.mxu0 0.0
        %594 = vmatpush2.msra.mxu0 0.0
        %595 = vmatprep.subr.mxu0 0.0
        %596 = vmatpush2.msra.mxu0 0.0
        %597 = vmatprep.subr.mxu0 0.0
        %598 = vmatpush2.msra.mxu0 0.0
        %599 = vmatprep.subr.mxu0 0.0
        %600 = vmatpush2.msra.mxu0 0.0
        %601 = vmatprep.subr.mxu0 0.0
        %602 = vmatpush2.msra.mxu0 0.0
        %603 = vmatprep.subr.mxu0 0.0
        %604 = vmatpush2.msra.mxu0 0.0
        %605 = vmatprep.subr.mxu0 0.0
        %606 = vmatpush2.msra.mxu0 0.0
        %607 = vmatprep.subr.mxu0 0.0
        %608 = vmatpush2.msra.mxu0 0.0
        %609 = vmatprep.subr.mxu0 0.0
        %610 = vmatpush2.msra.mxu0 0.0
        %611 = vmatprep.mubr.f32.mxu0 0.0
        %612 = vmatmul.mubr.f32.gmra.mxu0 %v524
        %v613 = vpop.f32.mrf.mxu0
        %v614 = vadd.f32 0.0, %v613
        %v615 = vpop.f32.mrf.mxu0
        %616 = vmatprep.mubr.f32.mxu0 0.0
        %617 = vmatmul.mubr.f32.gmra.mxu0 %v527
        %v618 = vpop.f32.mrf.mxu0
        %v619 = vadd.f32 0.0, %v618
        %v620 = vpop.f32.mrf.mxu0
        %621 = vmatprep.mubr.f32.mxu0 0.0
        %622 = vmatmul.mubr.f32.gmra.mxu0 %v530
        %v623 = vpop.f32.mrf.mxu0
        %v624 = vadd.f32 0.0, %v623
        %v625 = vpop.f32.mrf.mxu0
        %626 = vmatprep.mubr.f32.mxu0 0.0
        %627 = vmatmul.mubr.f32.gmra.mxu0 %v533
        %v628 = vpop.f32.mrf.mxu0
        %v629 = vadd.f32 0.0, %v628
        %v630 = vpop.f32.mrf.mxu0
        %631 = vmatprep.mubr.f32.mxu0 0.0
        %632 = vmatmul.mubr.f32.gmra.mxu0 %v536
        %v633 = vpop.f32.mrf.mxu0
        %v634 = vadd.f32 0.0, %v633
        %v635 = vpop.f32.mrf.mxu0
        %636 = vmatprep.mubr.f32.mxu0 0.0
        %637 = vmatmul.mubr.f32.gmra.mxu0 %v539
        %v638 = vpop.f32.mrf.mxu0
        %v639 = vadd.f32 0.0, %v638
        %v640 = vpop.f32.mrf.mxu0
        %641 = vmatprep.mubr.f32.mxu0 0.0
        %642 = vmatmul.mubr.f32.gmra.mxu0 %v542
        %v643 = vpop.f32.mrf.mxu0
        %v644 = vadd.f32 0.0, %v643
        %v645 = vpop.f32.mrf.mxu0
        %646 = vmatprep.mubr.f32.mxu0 0.0
        %647 = vmatmul.mubr.f32.gmra.mxu0 %v545
        %v648 = vpop.f32.mrf.mxu0
        %v649 = vadd.f32 0.0, %v648
        %v650 = vpop.f32.mrf.mxu0
        %651 = vdwg.mxu0
        %v653 = vsel %vm264, %v467, 0
        %v656 = vsel %vm264, %v468, 0
        %v659 = vsel %vm264, %v469, 0
        %v662 = vsel %vm264, %v470, 0
        %v665 = vsel %vm264, %v471, 0
        %v668 = vsel %vm264, %v472, 0
        %v671 = vsel %vm264, %v473, 0
        %v674 = vsel %vm264, %v474, 0
        %676 = vmatprep.subr.mxu0 0.0
        %677 = vmatpush1.msra.mxu0 0.0
        %678 = vmatprep.subr.mxu0 0.0
        %679 = vmatpush1.msra.mxu0 0.0
        %680 = vmatprep.subr.mxu0 0.0
        %681 = vmatpush1.msra.mxu0 0.0
        %682 = vmatprep.subr.mxu0 0.0
        %683 = vmatpush1.msra.mxu0 0.0
        %684 = vmatprep.subr.mxu0 0.0
        %685 = vmatpush1.msra.mxu0 0.0
        %686 = vmatprep.subr.mxu0 0.0
        %687 = vmatpush1.msra.mxu0 0.0
        %688 = vmatprep.subr.mxu0 0.0
        %689 = vmatpush1.msra.mxu0 0.0
        %690 = vmatprep.subr.mxu0 0.0
        %691 = vmatpush1.msra.mxu0 0.0
        %692 = vmatprep.subr.mxu0 0.0
        %693 = vmatpush1.msra.mxu0 %v514
        %694 = vmatprep.subr.mxu0 0.0
        %695 = vmatpush1.msra.mxu0 %v513
        %696 = vmatprep.subr.mxu0 0.0
        %697 = vmatpush1.msra.mxu0 %v512
        %698 = vmatprep.subr.mxu0 0.0
        %699 = vmatpush1.msra.mxu0 %v511
        %700 = vmatprep.subr.mxu0 0.0
        %701 = vmatpush1.msra.mxu0 %v510
        %702 = vmatprep.subr.mxu0 0.0
        %703 = vmatpush1.msra.mxu0 %v509
        %704 = vmatprep.subr.mxu0 0.0
        %705 = vmatpush1.msra.mxu0 %v508
        %706 = vmatprep.subr.mxu0 0.0
        %707 = vmatpush1.msra.mxu0 %v507
        %708 = vmatprep.subr.mxu0 0.0
        %709 = vmatpush2.msra.mxu0 0.0
        %710 = vmatprep.subr.mxu0 0.0
        %711 = vmatpush2.msra.mxu0 0.0
        %712 = vmatprep.subr.mxu0 0.0
        %713 = vmatpush2.msra.mxu0 0.0
        %714 = vmatprep.subr.mxu0 0.0
        %715 = vmatpush2.msra.mxu0 0.0
        %716 = vmatprep.subr.mxu0 0.0
        %717 = vmatpush2.msra.mxu0 0.0
        %718 = vmatprep.subr.mxu0 0.0
        %719 = vmatpush2.msra.mxu0 0.0
        %720 = vmatprep.subr.mxu0 0.0
        %721 = vmatpush2.msra.mxu0 0.0
        %722 = vmatprep.subr.mxu0 0.0
        %723 = vmatpush2.msra.mxu0 0.0
        %724 = vmatprep.subr.mxu0 0.0
        %725 = vmatpush2.msra.mxu0 0.0
        %726 = vmatprep.subr.mxu0 0.0
        %727 = vmatpush2.msra.mxu0 0.0
        %728 = vmatprep.subr.mxu0 0.0
        %729 = vmatpush2.msra.mxu0 0.0
        %730 = vmatprep.subr.mxu0 0.0
        %731 = vmatpush2.msra.mxu0 0.0
        %732 = vmatprep.subr.mxu0 0.0
        %733 = vmatpush2.msra.mxu0 0.0
        %734 = vmatprep.subr.mxu0 0.0
        %735 = vmatpush2.msra.mxu0 0.0
        %736 = vmatprep.subr.mxu0 0.0
        %737 = vmatpush2.msra.mxu0 0.0
        %738 = vmatprep.subr.mxu0 0.0
        %739 = vmatpush2.msra.mxu0 0.0
        %740 = vmatprep.mubr.f32.mxu0 0.0
        %741 = vmatmul.mubr.f32.gmra.mxu0 %v653
        %v742 = vpop.f32.mrf.mxu0
        %v743 = vadd.f32 %v614, %v742
        %v744 = vpop.f32.mrf.mxu0
        %745 = vmatprep.mubr.f32.mxu0 0.0
        %746 = vmatmul.mubr.f32.gmra.mxu0 %v656
        %v747 = vpop.f32.mrf.mxu0
        %v748 = vadd.f32 %v619, %v747
        %v749 = vpop.f32.mrf.mxu0
        %750 = vmatprep.mubr.f32.mxu0 0.0
        %751 = vmatmul.mubr.f32.gmra.mxu0 %v659
        %v752 = vpop.f32.mrf.mxu0
        %v753 = vadd.f32 %v624, %v752
        %v754 = vpop.f32.mrf.mxu0
        %755 = vmatprep.mubr.f32.mxu0 0.0
        %756 = vmatmul.mubr.f32.gmra.mxu0 %v662
        %v757 = vpop.f32.mrf.mxu0
        %v758 = vadd.f32 %v629, %v757
        %v759 = vpop.f32.mrf.mxu0
        %760 = vmatprep.mubr.f32.mxu0 0.0
        %761 = vmatmul.mubr.f32.gmra.mxu0 %v665
        %v762 = vpop.f32.mrf.mxu0
        %v763 = vadd.f32 %v634, %v762
        %v764 = vpop.f32.mrf.mxu0
        %765 = vmatprep.mubr.f32.mxu0 0.0
        %766 = vmatmul.mubr.f32.gmra.mxu0 %v668
        %v767 = vpop.f32.mrf.mxu0
        %v768 = vadd.f32 %v639, %v767
        %v769 = vpop.f32.mrf.mxu0
        %770 = vmatprep.mubr.f32.mxu0 0.0
        %771 = vmatmul.mubr.f32.gmra.mxu0 %v671
        %v772 = vpop.f32.mrf.mxu0
        %v773 = vadd.f32 %v644, %v772
        %v774 = vpop.f32.mrf.mxu0
        %775 = vmatprep.mubr.f32.mxu0 0.0
        %776 = vmatmul.mubr.f32.gmra.mxu0 %v674
        %v777 = vpop.f32.mrf.mxu0
        %v778 = vadd.f32 %v649, %v777
        %v779 = vpop.f32.mrf.mxu0
        %780 = vdwg.mxu0
        %781 = vst.msk [vmem:[%s246] sm:$0xff] %vm264, %v743
        %782 = vst.msk [vmem:[%s246 + $0x8] sm:$0xff] %vm264, %v748
        %783 = vst.msk [vmem:[%s246 + $0x10] sm:$0xff] %vm264, %v753
        %784 = vst.msk [vmem:[%s246 + $0x18] sm:$0xff] %vm264, %v758
        %785 = vst.msk [vmem:[%s246 + $0x20] sm:$0xff] %vm264, %v763
        %786 = vst.msk [vmem:[%s246 + $0x28] sm:$0xff] %vm264, %v768
        %787 = vst.msk [vmem:[%s246 + $0x30] sm:$0xff] %vm264, %v773
        %788 = vst.msk [vmem:[%s246 + $0x38] sm:$0xff] %vm264, %v778
        %s789 = smul.u32 8, %s19
        %p790 = scmp.lt.s32.totalorder %s789, 15
        %s791 = scalar_select %p790, %s789, 15
        %s792 = smul.addr %s791, 8
        %s793 = scalar_lea.vmem %s4, %s792
        // Predicated region
        $region49: #{tpu_custom_call.1} parent=35 // pred_check
          %p794 = pneg %p126
        $region50: #{tpu_custom_call.1} parent=35 // pred_check_branch
          %796 = sbr.rel (%p794) target = $region52
        $region51: #{tpu_custom_call.1} parent=35 // pred_region
          %s797 = smul.u32 8, %s19
        $region52: #{tpu_custom_call.1} parent=35 // pred_fallthru
          _
      $region36: #{tpu_custom_call.1} parent=5 // pred_fallthru
        _
      %p798 = scmp.le.s32.totalorder 2, %s14
      // Predicated region
      $region53: #{tpu_custom_call.1} parent=5 // pred_check
        %p799 = pneg %p798
      $region54: #{tpu_custom_call.1} parent=5 // pred_check_branch
        %801 = sbr.rel (%p799) target = $region56
      $region55: #{tpu_custom_call.1} parent=5 // pred_region
        %s802 = ssub.s32 %s14, 2
        // Predicated region
        $region57: #{tpu_custom_call.1} parent=55 // pred_check
          %p803 = pneg %p132
        $region58: #{tpu_custom_call.1} parent=55 // pred_check_branch
          %805 = sbr.rel (%p803) target = $region60
        $region59: #{tpu_custom_call.1} parent=55 // pred_region
          %s806 = smul.u32 8, %s20
          %p807 = scmp.lt.s32.totalorder %s806, 15
          %s808 = scalar_select %p807, %s806, 15
          %s809 = smul.addr %s808, 8
          %s810 = scalar_lea.vmem %s4, %s809
        $region60: #{tpu_custom_call.1} parent=55 // pred_fallthru
          _
      $region56: #{tpu_custom_call.1} parent=5 // pred_fallthru
        _
    $region6: #{tpu_custom_call.1} parent=1 // loop_footer
      %s18 = sadd.s32 1, %s14
    $region7: #{tpu_custom_call.1} parent=1 // loop_footer_branch
      %13 = sbr.rel target = $region3
    $region8: #{tpu_custom_call.1} parent=1 // loop_exit
      _
    %811 = vsyncpa [#allocation3], 1
    %s812 = scalar_lea.sflag [#allocation3], 1
    %813 = vsyncpa %s812, 1
    %814 = vsyncpa [#allocation5], 1

</llo_original>
